<compile_context>
chip_gen: v6e
topology: v6e:2x2x1
jax: 0.10.0
libtpu: 0.0.40
codegen_flags: <defaults>
</compile_context>

<pallas_src>
import functools
import math

import jax
import jax.numpy as jnp
from jax.experimental import pallas as pl
from jax.experimental.pallas import tpu as pltpu


_LANES = 512          # lane (last) axis of the 2-D view; multiple of 128
_BLOCK_ROWS = 512     # max sublane rows per grid step; multiple of 8 (~1 MiB f32 tile)
_PAD_LOGIT = -30.0    # sigmoid(-30) underflows vs f32 eps -> padded loss is exactly 0


def _focal_elems(x, t, gamma, alpha):
    """Elementwise focal-loss terms in float32 (matches the PyTorch math)."""
    p = jax.nn.sigmoid(x)
    pos = t == 1.0
    pt = jnp.where(pos, p, 1.0 - p)
    alpha_factor = jnp.where(pos, alpha, 1.0 - alpha)
    one_minus_pt = 1.0 - pt
    if gamma == 2.0:                       # default: avoid exp/log from pow
        modulating = one_minus_pt * one_minus_pt
    elif gamma == 1.0:
        modulating = one_minus_pt
    elif gamma == 0.0:
        modulating = jnp.ones_like(one_minus_pt)
    else:
        modulating = jnp.power(one_minus_pt, gamma)
    ce = -jnp.log(pt + 1e-10)              # keep reference (PyTorch) formulation
    return alpha_factor * modulating * ce


def _focal_reduce_kernel(x_ref, t_ref, out_ref, *, gamma, alpha):
    j = pl.program_id(1)                   # reduction ("arbitrary") axis
    x = x_ref[...].astype(jnp.float32)
    t = t_ref[...].astype(jnp.float32)
    loss = _focal_elems(x, t, gamma, alpha)

    @pl.when(j == 0)
    def _():
        out_ref[...] = loss

    @pl.when(j > 0)
    def _():
        out_ref[...] += loss


def _focal_none_kernel(x_ref, t_ref, out_ref, *, gamma, alpha):
    x = x_ref[...].astype(jnp.float32)
    t = t_ref[...].astype(jnp.float32)
    out_ref[...] = _focal_elems(x, t, gamma, alpha)


def _lane_dense_view(inputs, targets, lanes, block_rows):
    """Flatten to 1-D and reshape to a lane-dense (rows_padded, lanes) view."""
    total = math.prod(inputs.shape)
    x_flat = inputs.reshape(-1)
    t_flat = targets.reshape(-1)

    rows = -(-total // lanes)               # ceil(total / lanes)
    rows8 = ((rows + 7) // 8) * 8           # sublane-dense row count
    if rows8 <= block_rows:
        block_rows_eff = rows8
        grid_rows = 1
    else:
        grid_rows = -(-rows8 // block_rows)
        if grid_rows % 2:                   # keep it splittable across 2 cores
            grid_rows += 1
        block_rows_eff = ((-(-rows8 // grid_rows) + 7) // 8) * 8
    rows_padded = block_rows_eff * grid_rows

    padded_total = rows_padded * lanes
    if padded_total != total:
        pad = padded_total - total
        # Pad with (logit=-30, target=0): contributes exactly 0.0 loss in f32.
        x_flat = jnp.concatenate(
            [x_flat, jnp.full((pad,), _PAD_LOGIT, dtype=x_flat.dtype)])
        t_flat = jnp.concatenate(
            [t_flat, jnp.zeros((pad,), dtype=t_flat.dtype)])

    x2 = x_flat.reshape(rows_padded, lanes)
    t2 = t_flat.reshape(rows_padded, lanes)
    return x2, t2, block_rows_eff, grid_rows, total


def focal_loss(inputs, targets, gamma=2.0, alpha=0.25, reduction="mean",
               lanes=_LANES, block_rows=_BLOCK_ROWS):
    """Matches FocalLoss(gamma, alpha, reduction)(inputs, targets)."""
    b = inputs.shape[0]
    x2, t2, block_rows_eff, grid_rows, total = _lane_dense_view(
        inputs, targets, lanes, block_rows)
    n = total // b
    bytes_in = x2.size * x2.dtype.itemsize + t2.size * t2.dtype.itemsize

    if reduction in ("mean", "sum"):
        # Leading parallel axis: lets v7x's two TensorCores each take half.
        n_par = 2 if grid_rows >= 2 else 1
        steps = grid_rows // n_par

        kernel = functools.partial(
            _focal_reduce_kernel, gamma=gamma, alpha=alpha)
        partials = pl.pallas_call(
            kernel,
            out_shape=jax.ShapeDtypeStruct(
                (n_par * block_rows_eff, lanes), jnp.float32),
            grid_spec=pltpu.PrefetchScalarGridSpec(
                num_scalar_prefetch=0,
                grid=(n_par, steps),
                in_specs=[
                    pl.BlockSpec((block_rows_eff, lanes),
                                 lambda c, j: (c * steps + j, 0)),
                    pl.BlockSpec((block_rows_eff, lanes),
                                 lambda c, j: (c * steps + j, 0)),
                ],
                out_specs=pl.BlockSpec((block_rows_eff, lanes),
                                       lambda c, j: (c, 0)),
            ),
            compiler_params=pltpu.CompilerParams(
                dimension_semantics=("parallel", "arbitrary")),
            cost_estimate=pl.CostEstimate(
                flops=10 * x2.size,
                transcendentals=3 * x2.size,
                bytes_accessed=bytes_in + n_par * block_rows_eff * lanes * 4),
        )(x2, t2)
        total_loss = jnp.sum(partials)      # tiny epilogue reduce in XLA
        if reduction == "mean":
            return total_loss / jnp.float32(total)
        return total_loss

    # reduction == 'none': elementwise loss, shape (B, N) like torch's view().
    kernel = functools.partial(_focal_none_kernel, gamma=gamma, alpha=alpha)
    out2d = pl.pallas_call(
        kernel,
        out_shape=jax.ShapeDtypeStruct(x2.shape, jnp.float32),
        grid_spec=pltpu.PrefetchScalarGridSpec(
            num_scalar_prefetch=0,
            grid=(grid_rows,),
            in_specs=[
                pl.BlockSpec((block_rows_eff, lanes), lambda j: (j, 0)),
                pl.BlockSpec((block_rows_eff, lanes), lambda j: (j, 0)),
            ],
            out_specs=pl.BlockSpec((block_rows_eff, lanes), lambda j: (j, 0)),
        ),
        compiler_params=pltpu.CompilerParams(
            dimension_semantics=("parallel",)),
        cost_estimate=pl.CostEstimate(
            flops=10 * x2.size,
            transcendentals=3 * x2.size,
            bytes_accessed=bytes_in + x2.size * 4),
    )(x2, t2)
    return out2d.reshape(-1)[:total].reshape(b, n)


def _focal_loss_ref(inputs, targets, gamma=2.0, alpha=0.25, reduction="mean"):
    b = inputs.shape[0]
    x = inputs.reshape(b, -1).astype(jnp.float32)
    t = targets.reshape(b, -1).astype(jnp.float32)
    p = jax.nn.sigmoid(x)
    pt = jnp.where(t == 1.0, p, 1.0 - p)
    alpha_factor = jnp.where(t == 1.0, alpha, 1.0 - alpha)
    modulating = jnp.power(1.0 - pt, gamma)
    ce = -jnp.log(pt + 1e-10)
    loss = alpha_factor * modulating * ce
    if reduction == "mean":
        return loss.mean()
    if reduction == "sum":
        return loss.sum()
    return loss


if __name__ == "__main__":
    key = jax.random.PRNGKey(0)
    k1, k2 = jax.random.split(key)

    # logits (B, C, H, W) and binary targets of the same shape.
    B, C, H, W = 2, 4, 16, 16
    inputs = jax.random.normal(k1, (B, C, H, W), dtype=jnp.float32)
    targets = (jax.random.uniform(k2, (B, C, H, W)) > 0.8).astype(jnp.float32)

    out_mean = jax.block_until_ready(
        focal_loss(inputs, targets, gamma=2.0, alpha=0.25, reduction="mean"))
    out_sum = jax.block_until_ready(
        focal_loss(inputs, targets, gamma=2.0, alpha=0.25, reduction="sum"))
    out_none = jax.block_until_ready(
        focal_loss(inputs, targets, gamma=2.0, alpha=0.25, reduction="none"))

    ref_mean = _focal_loss_ref(inputs, targets, reduction="mean")
    ref_sum = _focal_loss_ref(inputs, targets, reduction="sum")
    ref_none = _focal_loss_ref(inputs, targets, reduction="none")

    assert jnp.allclose(out_mean, ref_mean, rtol=1e-5, atol=1e-6), (out_mean, ref_mean)
    assert jnp.allclose(out_sum, ref_sum, rtol=1e-5, atol=1e-5), (out_sum, ref_sum)
    assert jnp.allclose(out_none, ref_none, rtol=1e-5, atol=1e-6)

    print("KERNEL_OK")
</pallas_src>

<mosaic_0001>
module attributes {stable_mosaic.version = 11 : i64} {
  func.func @_focal_reduce_kernel(%arg0: i32, %arg1: i32, %arg2: memref<8x512xf32, #tpu.memory_space<vmem>>, %arg3: memref<8x512xf32, #tpu.memory_space<vmem>>, %arg4: memref<8x512xf32, #tpu.memory_space<vmem>>) attributes {dimension_semantics = [#tpu.dimension_semantics<parallel>, #tpu.dimension_semantics<arbitrary>], iteration_bounds = array<i64: 1, 1>, scalar_prefetch = 0 : i64, scratch_operands = 0 : i64, tpu.core_type = #tpu.core_type<tc>, window_params = [{transform_indices = @transform_0, window_bounds = array<i64: 8, 512>}, {transform_indices = @transform_1, window_bounds = array<i64: 8, 512>}, {transform_indices = @transform_2, window_bounds = array<i64: 8, 512>}]} {
    %c0 = arith.constant 0 : index
    %c0_0 = arith.constant 0 : index
    %0 = vector.load %arg2[%c0, %c0_0] : memref<8x512xf32, #tpu.memory_space<vmem>>, vector<8x512xf32>
    %c0_1 = arith.constant 0 : index
    %c0_2 = arith.constant 0 : index
    %1 = vector.load %arg3[%c0_1, %c0_2] : memref<8x512xf32, #tpu.memory_space<vmem>>, vector<8x512xf32>
    %2 = arith.negf %0 : vector<8x512xf32>
    %3 = math.exp %2 : vector<8x512xf32>
    %cst = arith.constant 1.000000e+00 : f32
    %4 = vector.broadcast %cst : f32 to vector<8x512xf32>
    %5 = arith.addf %4, %3 : vector<8x512xf32>
    %6 = arith.divf %4, %5 : vector<8x512xf32>
    %cst_3 = arith.constant 1.000000e+00 : f32
    %7 = vector.broadcast %cst_3 : f32 to vector<8x512xf32>
    %8 = arith.cmpf oeq, %1, %7 : vector<8x512xf32>
    %cst_4 = arith.constant 1.000000e+00 : f32
    %9 = vector.broadcast %cst_4 : f32 to vector<8x512xf32>
    %10 = arith.subf %9, %6 : vector<8x512xf32>
    %11 = arith.select %8, %6, %10 : vector<8x512xi1>, vector<8x512xf32>
    %cst_5 = arith.constant 2.500000e-01 : f32
    %cst_6 = arith.constant 7.500000e-01 : f32
    %12 = vector.broadcast %cst_5 : f32 to vector<8x512xf32>
    %13 = vector.broadcast %cst_6 : f32 to vector<8x512xf32>
    %14 = arith.select %8, %12, %13 : vector<8x512xi1>, vector<8x512xf32>
    %cst_7 = arith.constant 1.000000e+00 : f32
    %15 = vector.broadcast %cst_7 : f32 to vector<8x512xf32>
    %16 = arith.subf %15, %11 : vector<8x512xf32>
    %17 = arith.mulf %16, %16 : vector<8x512xf32>
    %cst_8 = arith.constant 1.000000e-10 : f32
    %18 = vector.broadcast %cst_8 : f32 to vector<8x512xf32>
    %19 = arith.addf %11, %18 : vector<8x512xf32>
    %20 = math.log %19 : vector<8x512xf32>
    %cst_9 = arith.constant 0.000000e+00 : f32
    %21 = vector.broadcast %cst_9 : f32 to vector<8x512xf32>
    %22 = arith.subf %21, %20 : vector<8x512xf32>
    %23 = arith.mulf %14, %17 : vector<8x512xf32>
    %24 = arith.mulf %23, %22 : vector<8x512xf32>
    %c0_i32 = arith.constant 0 : i32
    %25 = arith.cmpi eq, %arg1, %c0_i32 : i32
    %26 = arith.extui %25 : i1 to i32
    %c0_i32_10 = arith.constant 0 : i32
    %27 = arith.cmpi ne, %26, %c0_i32_10 : i32
    scf.if %27 {
      %c0_13 = arith.constant 0 : index
      %c0_14 = arith.constant 0 : index
      %31 = vector.load %arg4[%c0_13, %c0_14] : memref<8x512xf32, #tpu.memory_space<vmem>>, vector<8x512xf32>
      tpu.vector_store %arg4[%c0_13, %c0_14], %24 {strides = array<i32>} : memref<8x512xf32, #tpu.memory_space<vmem>>, vector<8x512xf32>,
    } else {
    }
    %c0_i32_11 = arith.constant 0 : i32
    %28 = arith.cmpi sgt, %arg1, %c0_i32_11 : i32
    %29 = arith.extui %28 : i1 to i32
    %c0_i32_12 = arith.constant 0 : i32
    %30 = arith.cmpi ne, %29, %c0_i32_12 : i32
    scf.if %30 {
      %c0_13 = arith.constant 0 : index
      %c0_14 = arith.constant 0 : index
      %31 = vector.load %arg4[%c0_13, %c0_14] : memref<8x512xf32, #tpu.memory_space<vmem>>, vector<8x512xf32>
      %32 = arith.addf %31, %24 : vector<8x512xf32>
      %c0_15 = arith.constant 0 : index
      %c0_16 = arith.constant 0 : index
      %33 = vector.load %arg4[%c0_15, %c0_16] : memref<8x512xf32, #tpu.memory_space<vmem>>, vector<8x512xf32>
      tpu.vector_store %arg4[%c0_15, %c0_16], %32 {strides = array<i32>} : memref<8x512xf32, #tpu.memory_space<vmem>>, vector<8x512xf32>,
    } else {
    }
    return
  }
  func.func @transform_0(%arg0: i32, %arg1: i32) -> (i32, i32) {
    %c1_i32 = arith.constant 1 : i32
    %0 = arith.muli %arg0, %c1_i32 : i32
    %1 = arith.addi %0, %arg1 : i32
    %c0_i32 = arith.constant 0 : i32
    %c0_i32_0 = arith.constant 0 : i32
    return %1, %c0_i32 : i32, i32
  }
  func.func @transform_1(%arg0: i32, %arg1: i32) -> (i32, i32) {
    %c1_i32 = arith.constant 1 : i32
    %0 = arith.muli %arg0, %c1_i32 : i32
    %1 = arith.addi %0, %arg1 : i32
    %c0_i32 = arith.constant 0 : i32
    %c0_i32_0 = arith.constant 0 : i32
    return %1, %c0_i32 : i32, i32
  }
  func.func @transform_2(%arg0: i32, %arg1: i32) -> (i32, i32) {
    %c0_i32 = arith.constant 0 : i32
    %c0_i32_0 = arith.constant 0 : i32
    return %arg0, %c0_i32 : i32, i32
  }
}

</mosaic_0001>

<llo_original>
// kernel: tpu_custom_call.1
$region0: #{tpu_custom_call.1}
  #allocation0 [shape = 'u32[]', space=smem, size = 0x4, offset = 0x4, fixed_abs, tag = 'smem constant byte address 0x4 - core index']
  #allocation1 [shape = 'u32[144,128]{1,0:T(1,128)}', space=vmem, size = 0x12000, scoped, tag = 'internal scratch']
  %s0 = inlined_call_operand.hbm [shape: f32[8,512], index: 0, kind: input, shape index: {}]
  %s1 = inlined_call_operand.hbm [shape: f32[8,512], index: 1, kind: input, shape index: {}]
  %s2 = inlined_call_operand.hbm [shape: f32[8,512], index: 2, kind: output, shape index: {}]
  %s3 = sld [smem:[#allocation0]]
  $region34: #{tpu_custom_call.1} parent=0
    _
  %s5 = ssub.s32 1, %s3
  %s6 = scalar_select 0, %s5, %s3
  $region1: #{tpu_custom_call.1} parent=0
    #allocation2 [shape = 'u8[16384]{0}', space=vmem, size = 0x4000, scoped, tag = 'input window, operand 0, single buffered']
    #allocation3 [shape = 's32[1]{0}', space=sflag, size = 0x4, scoped, tag = 'scoped memory for tpu_custom_call.1']
    #allocation4 [shape = 's32[1]{0}', space=sflag, size = 0x4, scoped, tag = 'scoped memory for tpu_custom_call.1']
    #allocation5 [shape = 'u8[16384]{0}', space=vmem, size = 0x4000, scoped, tag = 'input window, operand 1, single buffered']
    #allocation6 [shape = 's32[1]{0}', space=sflag, size = 0x4, scoped, tag = 'scoped memory for tpu_custom_call.1']
    #allocation7 [shape = 'u8[16384]{0}', space=vmem, size = 0x4000, scoped, tag = 'output window, operand 0, single buffered']
    %7 = vsyncpa [#allocation3], 0
    %8 = vsyncpa [#allocation6], 0
    %9 = vsyncpa [#allocation4], 0
    // Predicated region
    $region2: #{tpu_custom_call.1} parent=1 // pred_check
      _
    $region3: #{tpu_custom_call.1} parent=1 // pred_check_branch
      %11 = sbr.rel (0) target = $region5
    $region4: #{tpu_custom_call.1} parent=1 // pred_region
      %s12 = sadd.s32 0, 0
      %s14 = ssub.s32 512, 512
      %15 = vsyncadd [#allocation3], %s14
      %s16 = smul.addr %s12, 4
      %s17 = smul.addr %s16, 128
      %s18 = scalar_lea.hbm %s0, %s17
      %s20 = sshll.u32 [#allocation2], 4
      %s21 = int_to_ptr.vmem [resolvable:$true] %s20
      %23 = dma.hbm_to_vmem [thread:$0]  %s18, 512, %s21, [#allocation3]
    $region5: #{tpu_custom_call.1} parent=1 // pred_fallthru
      _
    // Predicated region
    $region6: #{tpu_custom_call.1} parent=1 // pred_check
      _
    $region7: #{tpu_custom_call.1} parent=1 // pred_check_branch
      %25 = sbr.rel (0) target = $region9
    $region8: #{tpu_custom_call.1} parent=1 // pred_region
      %s26 = sadd.s32 0, 0
      %s28 = ssub.s32 512, 512
      %29 = vsyncadd [#allocation6], %s28
      %s30 = smul.addr %s26, 4
      %s31 = smul.addr %s30, 128
      %s32 = scalar_lea.hbm %s1, %s31
      %s34 = sshll.u32 [#allocation5], 4
      %s35 = int_to_ptr.vmem [resolvable:$true] %s34
      %37 = dma.hbm_to_vmem [thread:$0]  %s32, 512, %s35, [#allocation6]
    $region9: #{tpu_custom_call.1} parent=1 // pred_fallthru
      _
    // Predicated region
    $region10: #{tpu_custom_call.1} parent=1 // pred_check
      _
    $region11: #{tpu_custom_call.1} parent=1 // pred_check_branch
      %39 = sbr.rel (0) target = $region13
    $region12: #{tpu_custom_call.1} parent=1 // pred_region
      %40 = dma.done [#allocation3], 512
    $region13: #{tpu_custom_call.1} parent=1 // pred_fallthru
      _
    // Predicated region
    $region14: #{tpu_custom_call.1} parent=1 // pred_check
      _
    $region15: #{tpu_custom_call.1} parent=1 // pred_check_branch
      %42 = sbr.rel (0) target = $region17
    $region16: #{tpu_custom_call.1} parent=1 // pred_region
      %43 = dma.done [#allocation6], 512
    $region17: #{tpu_custom_call.1} parent=1 // pred_fallthru
      _
    %s44 = sadd.s32 0, 0
    %s45 = sadd.s32 0, 0
    %v46 = vld [vmem:[#allocation2] sm:$0xff]
    %v47 = vld [vmem:[#allocation2 + $0x8] sm:$0xff]
    %v48 = vld [vmem:[#allocation2 + $0x10] sm:$0xff]
    %v49 = vld [vmem:[#allocation2 + $0x18] sm:$0xff]
    %v50 = vld [vmem:[#allocation5] sm:$0xff]
    %v51 = vld [vmem:[#allocation5 + $0x8] sm:$0xff]
    %v52 = vld [vmem:[#allocation5 + $0x10] sm:$0xff]
    %v53 = vld [vmem:[#allocation5 + $0x18] sm:$0xff]
    %v54 = vxor.u32 %v46, 2147483648
    %v55 = vxor.u32 %v47, 2147483648
    %v56 = vxor.u32 %v48, 2147483648
    %v57 = vxor.u32 %v49, 2147483648
    %v58 = vmul.f32 %v54, 1.442695
    %v59 = vpow.pop %v58
    %v60 = vmul.f32 %v55, 1.442695
    %v61 = vpow.pop %v60
    %v62 = vmul.f32 %v56, 1.442695
    %v63 = vpow.pop %v62
    %v64 = vmul.f32 %v57, 1.442695
    %v65 = vpow.pop %v64
    %v66 = vadd.f32 %v59, 1.0
    %v67 = vadd.f32 %v61, 1.0
    %v68 = vadd.f32 %v63, 1.0
    %v69 = vadd.f32 %v65, 1.0
    %v70 = vrcp.pop %v66
    %v71 = vmul.f32 1.0, %v70
    %v72 = vrcp.pop %v67
    %v73 = vmul.f32 1.0, %v72
    %v74 = vrcp.pop %v68
    %v75 = vmul.f32 1.0, %v74
    %v76 = vrcp.pop %v69
    %v77 = vmul.f32 1.0, %v76
    %vm78 = vcmp.eq.f32.partialorder %v50, 1.0
    %vm79 = vcmp.eq.f32.partialorder %v51, 1.0
    %vm80 = vcmp.eq.f32.partialorder %v52, 1.0
    %vm81 = vcmp.eq.f32.partialorder %v53, 1.0
    %v82 = vsub.f32 1.0, %v71
    %v83 = vsub.f32 1.0, %v73
    %v84 = vsub.f32 1.0, %v75
    %v85 = vsub.f32 1.0, %v77
    %v86 = vsel %vm78, %v71, %v82
    %v87 = vsel %vm79, %v73, %v83
    %v88 = vsel %vm80, %v75, %v84
    %v89 = vsel %vm81, %v77, %v85
    %v90 = vsel %vm78, 0.25, 0.75
    %v91 = vsel %vm79, 0.25, 0.75
    %v92 = vsel %vm80, 0.25, 0.75
    %v93 = vsel %vm81, 0.25, 0.75
    %v94 = vsub.f32 1.0, %v86
    %v95 = vsub.f32 1.0, %v87
    %v96 = vsub.f32 1.0, %v88
    %v97 = vsub.f32 1.0, %v89
    %v98 = vmul.f32 %v94, %v94
    %v99 = vmul.f32 %v95, %v95
    %v100 = vmul.f32 %v96, %v96
    %v101 = vmul.f32 %v97, %v97
    %v102 = vadd.f32 %v86, 1e-10
    %v103 = vadd.f32 %v87, 1e-10
    %v104 = vadd.f32 %v88, 1e-10
    %v105 = vadd.f32 %v89, 1e-10
    %v106 = vlog2.pop %v102
    %v107 = vmul.f32 %v106, 0.6931472
    %v108 = vlog2.pop %v103
    %v109 = vmul.f32 %v108, 0.6931472
    %v110 = vlog2.pop %v104
    %v111 = vmul.f32 %v110, 0.6931472
    %v112 = vlog2.pop %v105
    %v113 = vmul.f32 %v112, 0.6931472
    %v114 = vsub.f32 0.0, %v107
    %v115 = vsub.f32 0.0, %v109
    %v116 = vsub.f32 0.0, %v111
    %v117 = vsub.f32 0.0, %v113
    %v118 = vmul.f32 %v90, %v98
    %v119 = vmul.f32 %v91, %v99
    %v120 = vmul.f32 %v92, %v100
    %v121 = vmul.f32 %v93, %v101
    %v122 = vmul.f32 %v118, %v114
    %v123 = vmul.f32 %v119, %v115
    %v124 = vmul.f32 %v120, %v116
    %v125 = vmul.f32 %v121, %v117
    %p126 = scmp.eq.s32.totalorder 0, 0
    // Predicated region
    $region18: #{tpu_custom_call.1} parent=1 // pred_check
      %p127 = pneg %p126
    $region19: #{tpu_custom_call.1} parent=1 // pred_check_branch
      %129 = sbr.rel (%p127) target = $region21
    $region20: #{tpu_custom_call.1} parent=1 // pred_region
      %130 = vst [vmem:[#allocation7] sm:$0xff] %v122
      %131 = vst [vmem:[#allocation7 + $0x8] sm:$0xff] %v123
      %132 = vst [vmem:[#allocation7 + $0x10] sm:$0xff] %v124
      %133 = vst [vmem:[#allocation7 + $0x18] sm:$0xff] %v125
    $region21: #{tpu_custom_call.1} parent=1 // pred_fallthru
      _
    %p134 = scmp.gt.s32.totalorder 0, 0
    // Predicated region
    $region22: #{tpu_custom_call.1} parent=1 // pred_check
      %p135 = pneg %p134
    $region23: #{tpu_custom_call.1} parent=1 // pred_check_branch
      %137 = sbr.rel (%p135) target = $region25
    $region24: #{tpu_custom_call.1} parent=1 // pred_region
      %v138 = vld [vmem:[#allocation7] sm:$0xff]
      %v139 = vld [vmem:[#allocation7 + $0x8] sm:$0xff]
      %v140 = vld [vmem:[#allocation7 + $0x10] sm:$0xff]
      %v141 = vld [vmem:[#allocation7 + $0x18] sm:$0xff]
      %v142 = vadd.f32 %v138, %v122
      %v143 = vadd.f32 %v139, %v123
      %v144 = vadd.f32 %v140, %v124
      %v145 = vadd.f32 %v141, %v125
      %146 = vst [vmem:[#allocation7] sm:$0xff] %v142
      %147 = vst [vmem:[#allocation7 + $0x8] sm:$0xff] %v143
      %148 = vst [vmem:[#allocation7 + $0x10] sm:$0xff] %v144
      %149 = vst [vmem:[#allocation7 + $0x18] sm:$0xff] %v145
    $region25: #{tpu_custom_call.1} parent=1 // pred_fallthru
      _
    // Predicated region
    $region26: #{tpu_custom_call.1} parent=1 // pred_check
      _
    $region27: #{tpu_custom_call.1} parent=1 // pred_check_branch
      %151 = sbr.rel (0) target = $region29
    $region28: #{tpu_custom_call.1} parent=1 // pred_region
      %s153 = ssub.s32 512, 512
      %154 = vsyncadd [#allocation4], %s153
      %s156 = sshll.u32 [#allocation7], 4
      %s157 = int_to_ptr.vmem [resolvable:$true] %s156
      %159 = dma.vmem_to_hbm [thread:$0]  %s157, 512, %s2, [#allocation4]
    $region29: #{tpu_custom_call.1} parent=1 // pred_fallthru
      _
    // Predicated region
    $region30: #{tpu_custom_call.1} parent=1 // pred_check
      _
    $region31: #{tpu_custom_call.1} parent=1 // pred_check_branch
      %161 = sbr.rel (0) target = $region33
    $region32: #{tpu_custom_call.1} parent=1 // pred_region
      %162 = dma.done [#allocation4], 512
    $region33: #{tpu_custom_call.1} parent=1 // pred_fallthru
      _
    %163 = vsyncpa [#allocation3], 1
    %164 = vsyncpa [#allocation6], 1
    %165 = vsyncpa [#allocation4], 1

</llo_original>
